<compile_context>
chip_gen: v6e
topology: v6e:2x2x1
jax: 0.10.0
libtpu: 0.0.40
codegen_flags: <defaults>
</compile_context>

<pallas_src>
import functools

import jax
import jax.numpy as jnp
from jax import lax
from jax.experimental import pallas as pl
from jax.experimental.pallas import tpu as pltpu

EPS = 1e-5        # torch.nn.BatchNorm2d default
COUT = 64         # conv1 output channels
COUT_PAD = 128    # pad the channel (lane) dim to a full 128-lane vreg


def _feature_loss_kernel(pd_ref, w_ref, out_ref, *, tm, chunk, bps, m_total):
    s = pl.program_id(0)          # "parallel" split axis (sharded across TCs on v7x)
    i = pl.program_id(1)          # "arbitrary" reduction axis over row-blocks

    @pl.when(i == 0)
    def _():
        out_ref[...] = jnp.zeros_like(out_ref)

    row0 = (s * bps + i) * tm     # first global patch-row of this block
    nch = tm // chunk

    def body(c, acc):
        base = pl.multiple_of(c * chunk, chunk)
        # conv1 on a bf16 im2col diff sub-slab; MXU accumulates in f32.
        d = jnp.abs(jnp.dot(pd_ref[pl.ds(base, chunk), :], w_ref[...],
                            preferred_element_type=jnp.float32))
        # Mask rows past the true M (ragged/clamped last-block contents are undefined).
        rid = row0 + base + lax.broadcasted_iota(jnp.int32, (chunk, COUT_PAD), 0)
        d = jnp.where(rid < m_total, d, 0.0)
        # Fold rows into an (8, 128) partial with pure VPU adds (tile-aligned reshape,
        # no relayout); lanes = output channels.
        return acc + jnp.sum(d.reshape(chunk // 8, 8, COUT_PAD), axis=0)

    acc = lax.fori_loop(0, nch, body, jnp.zeros((8, COUT_PAD), jnp.float32),
                        unroll=True)
    out_ref[...] += acc           # resident output block across the reduction axis


def _im2col_nhwc(x, kh, kw, stride, pad):
    n, h, w, c = x.shape
    xp = jnp.pad(x, ((0, 0), (pad, pad), (pad, pad), (0, 0)))
    oh = (h + 2 * pad - kh) // stride + 1
    ow = (w + 2 * pad - kw) // stride + 1
    cols = []
    for i in range(kh):
        for j in range(kw):
            cols.append(xp[:, i:i + stride * oh:stride, j:j + stride * ow:stride, :])
    patches = jnp.stack(cols, axis=3)                        # (N, OH, OW, KH*KW, C)
    return patches.reshape(n * oh * ow, kh * kw * c), oh, ow


def make_params(key):
    k1, k2, k3, k4, k5 = jax.random.split(key, 5)
    # conv1 weight in OIHW (64, 3, 7, 7) -> matmul weight (KH*KW*Cin, Cout)
    w_oihw = jax.random.normal(k1, (64, 3, 7, 7), jnp.float32) * 0.05
    w_mat = jnp.transpose(w_oihw, (2, 3, 1, 0)).reshape(7 * 7 * 3, 64)
    gamma = 1.0 + 0.1 * jax.random.normal(k2, (1, 64), jnp.float32)
    beta = 0.1 * jax.random.normal(k3, (1, 64), jnp.float32)
    mean = 0.1 * jax.random.normal(k4, (1, 64), jnp.float32)
    var = jnp.abs(jax.random.normal(k5, (1, 64), jnp.float32)) + 0.5
    return {"w": w_mat, "gamma": gamma, "beta": beta, "mean": mean, "var": var}


def custom_feature_loss(fake_nchw, target_nchw, params, *,
                        tm=4096, chunk=512, num_splits=1):
    # v5e/v6e: num_splits=1 (single TensorCore).  v7x: num_splits=2 shards the leading
    # "parallel" grid axis across both TensorCores; keep tm large to amortize the
    # ~0.35us per-grid-step overhead at 3.2 TB/s HBM.
    n = fake_nchw.shape[0]
    kh = kw = 7
    stride, pad = 2, 3

    # diff-first: conv(fake) - conv(target) == conv(fake - target); NCHW -> NHWC.
    d_img = jnp.transpose(
        fake_nchw.astype(jnp.float32) - target_nchw.astype(jnp.float32), (0, 2, 3, 1))
    pd, oh, ow = _im2col_nhwc(d_img, kh, kw, stride, pad)     # (M, 147) f32
    m, k = pd.shape

    # bf16 patches / weight: halves HBM traffic (kernel is HBM-bound); MXU accums f32,
    # all elementwise math stays f32 (v5e VPU has no bf16).
    pd = pd.astype(jnp.bfloat16)
    w = jnp.zeros((k, COUT_PAD), jnp.bfloat16).at[:, :COUT].set(
        params["w"].astype(jnp.bfloat16))

    # Row tiling: num_splits "parallel" entries x bps row-blocks ("arbitrary" axis).
    per_split = -(-m // num_splits)
    if per_split < tm:
        tm = max(16, -(-per_split // 16) * 16)                # bf16 sublane-tile aligned
    chunk = max(8, (min(chunk, tm) // 8) * 8)
    if tm % chunk != 0:
        chunk = tm                                            # single sub-chunk fallback
    bps = -(-per_split // tm)                                 # row-blocks per split

    kern = functools.partial(_feature_loss_kernel,
                             tm=tm, chunk=chunk, bps=bps, m_total=m)
    partial_sums = pl.pallas_call(
        kern,
        out_shape=jax.ShapeDtypeStruct((num_splits * 8, COUT_PAD), jnp.float32),
        grid=(num_splits, bps),
        in_specs=[
            pl.BlockSpec((tm, k), lambda s, i: (s * bps + i, 0)),
            pl.BlockSpec((k, COUT_PAD), lambda s, i: (0, 0)),
        ],
        out_specs=pl.BlockSpec((8, COUT_PAD), lambda s, i: (s, 0)),
        compiler_params=pltpu.CompilerParams(
            dimension_semantics=("parallel", "arbitrary")),
    )(pd, w)

    # Tiny epilogue on 64 values: per-channel sum(|d|) -> weighted scalar loss.
    col = jnp.sum(partial_sums.reshape(num_splits, 8, COUT_PAD), axis=(0, 1))[:COUT]
    abs_scale = jnp.abs(params["gamma"] * lax.rsqrt(params["var"] + EPS)).reshape(COUT)
    n_elems = n * COUT * oh * ow
    # wgts = [1, 1]: L1_mean(act0) + L1_mean(act1) = (sum|d| + sum(|d|*|scale|)) / n
    return (jnp.sum(col) + jnp.sum(col * abs_scale)) / n_elems


def _reference_loss(fake_nchw, target_nchw, params):
    # Pure-JAX reference with the FULL bn1 formula (mean/beta included), conv applied
    # separately to fake and target (module semantics), bf16 weight/patch numerics.
    fake = jnp.transpose(fake_nchw, (0, 2, 3, 1)).astype(jnp.float32)
    target = jnp.transpose(target_nchw, (0, 2, 3, 1)).astype(jnp.float32)
    pf, _, _ = _im2col_nhwc(fake, 7, 7, 2, 3)
    pt, _, _ = _im2col_nhwc(target, 7, 7, 2, 3)
    wb = params["w"].astype(jnp.bfloat16)
    cf = jnp.dot(pf.astype(jnp.bfloat16), wb, preferred_element_type=jnp.float32)
    ct = jnp.dot(pt.astype(jnp.bfloat16), wb, preferred_element_type=jnp.float32)
    l0 = jnp.mean(jnp.abs(cf - ct))
    inv_std = 1.0 / jnp.sqrt(params["var"] + EPS)
    scale = params["gamma"] * inv_std
    bf = (cf - params["mean"]) * scale + params["beta"]
    bt = (ct - params["mean"]) * scale + params["beta"]
    l1 = jnp.mean(jnp.abs(bf - bt))
    return l0 + l1


if __name__ == "__main__":
    key = jax.random.PRNGKey(0)
    kp, kf, kt = jax.random.split(key, 3)
    params = make_params(kp)

    # small, ResNet50-consistent inputs: batch=2, 3 channels (RGB), 16x16 spatial
    fake = jax.random.normal(kf, (2, 3, 16, 16), jnp.float32)
    target_rgb = jax.random.normal(kt, (2, 3, 16, 16), jnp.float32)

    loss = jax.block_until_ready(custom_feature_loss(fake, target_rgb, params))
    ref = jax.block_until_ready(_reference_loss(fake, target_rgb, params))
    assert abs(float(loss) - float(ref)) <= 1e-3 * max(1.0, abs(float(ref))), (loss, ref)

    print("KERNEL_OK")
</pallas_src>

<mosaic_0001>
module attributes {stable_mosaic.version = 11 : i64} {
  func.func @_feature_loss_kernel(%arg0: i32, %arg1: i32, %arg2: memref<128x147xbf16, #tpu.memory_space<vmem>>, %arg3: memref<147x128xbf16, #tpu.memory_space<vmem>>, %arg4: memref<8x128xf32, #tpu.memory_space<vmem>>) attributes {dimension_semantics = [#tpu.dimension_semantics<parallel>, #tpu.dimension_semantics<arbitrary>], iteration_bounds = array<i64: 1, 1>, scalar_prefetch = 0 : i64, scratch_operands = 0 : i64, tpu.core_type = #tpu.core_type<tc>, window_params = [{transform_indices = @transform_0, window_bounds = array<i64: 128, 147>}, {pipeline_mode = #tpu.pipeline_mode<synchronous>, transform_indices = @transform_1, window_bounds = array<i64: 147, 128>}, {transform_indices = @transform_2, window_bounds = array<i64: 8, 128>}]} {
    %c0_i32 = arith.constant 0 : i32
    %0 = arith.cmpi eq, %arg1, %c0_i32 : i32
    %1 = arith.extui %0 : i1 to i32
    %c0_i32_0 = arith.constant 0 : i32
    %2 = arith.cmpi ne, %1, %c0_i32_0 : i32
    scf.if %2 {
      %cst_14 = arith.constant 0.000000e+00 : f32
      %28 = vector.broadcast %cst_14 : f32 to vector<8x128xf32>
      %c0_15 = arith.constant 0 : index
      %c0_16 = arith.constant 0 : index
      %29 = vector.load %arg4[%c0_15, %c0_16] : memref<8x128xf32, #tpu.memory_space<vmem>>, vector<8x128xf32>
      tpu.vector_store %arg4[%c0_15, %c0_16], %28 {strides = array<i32>} : memref<8x128xf32, #tpu.memory_space<vmem>>, vector<8x128xf32>,
    } else {
    }
    %c1_i32 = arith.constant 1 : i32
    %3 = arith.muli %arg0, %c1_i32 : i32
    %4 = arith.addi %3, %arg1 : i32
    %c128_i32 = arith.constant 128 : i32
    %5 = arith.muli %4, %c128_i32 : i32
    %cst = arith.constant 0.000000e+00 : f32
    %6 = vector.broadcast %cst : f32 to vector<8x128xf32>
    %c0_i32_1 = arith.constant 0 : i32
    %c128_i32_2 = arith.constant 128 : i32
    %7 = arith.muli %c0_i32_1, %c128_i32_2 : i32
    %8 = tpu.assume_multiple %7, 128 : i32
    %9 = arith.index_cast %8 : i32 to index
    %c0 = arith.constant 0 : index
    %10 = vector.load %arg2[%9, %c0] : memref<128x147xbf16, #tpu.memory_space<vmem>>, vector<128x147xbf16>
    %c0_3 = arith.constant 0 : index
    %c0_4 = arith.constant 0 : index
    %11 = vector.load %arg3[%c0_3, %c0_4] : memref<147x128xbf16, #tpu.memory_space<vmem>>, vector<147x128xbf16>
    %cst_5 = arith.constant dense<0.000000e+00> : vector<128x128xf32>
    %12 = tpu.matmul %10, %11, %cst_5 {dimension_numbers = #tpu.dot_dimension_numbers<[1], [0], [0], [1], [0, 0, 1, 1], [], []>} : vector<128x147xbf16>, vector<147x128xbf16>, vector<128x128xf32> -> vector<128x128xf32>
    %13 = math.absf %12 : vector<128x128xf32>
    %14 = arith.addi %5, %8 : i32
    %15 = tpu.iota {dimensions = array<i32: 0>} : vector<128x128xi32>
    %16 = vector.broadcast %14 : i32 to vector<128x128xi32>
    %17 = arith.addi %16, %15 : vector<128x128xi32>
    %c128_i32_6 = arith.constant 128 : i32
    %18 = vector.broadcast %c128_i32_6 : i32 to vector<128x128xi32>
    %19 = arith.cmpi slt, %17, %18 : vector<128x128xi32>
    %cst_7 = arith.constant 0.000000e+00 : f32
    %20 = vector.broadcast %cst_7 : f32 to vector<128x128xf32>
    %21 = arith.select %19, %13, %20 : vector<128x128xi1>, vector<128x128xf32>
    %22 = vector.shape_cast %21 : vector<128x128xf32> to vector<16x8x128xf32>
    %cst_8 = arith.constant dense<0.000000e+00> : vector<8x128xf32>
    %23 = vector.multi_reduction <add>, %22, %cst_8 [0] : vector<16x8x128xf32> to vector<8x128xf32>
    %24 = arith.addf %6, %23 : vector<8x128xf32>
    %c1_i32_9 = arith.constant 1 : i32
    %c0_10 = arith.constant 0 : index
    %c0_11 = arith.constant 0 : index
    %25 = vector.load %arg4[%c0_10, %c0_11] : memref<8x128xf32, #tpu.memory_space<vmem>>, vector<8x128xf32>
    %26 = arith.addf %25, %24 : vector<8x128xf32>
    %c0_12 = arith.constant 0 : index
    %c0_13 = arith.constant 0 : index
    %27 = vector.load %arg4[%c0_12, %c0_13] : memref<8x128xf32, #tpu.memory_space<vmem>>, vector<8x128xf32>
    tpu.vector_store %arg4[%c0_12, %c0_13], %26 {strides = array<i32>} : memref<8x128xf32, #tpu.memory_space<vmem>>, vector<8x128xf32>,
    return
  }
  func.func @transform_0(%arg0: i32, %arg1: i32) -> (i32, i32) {
    %c1_i32 = arith.constant 1 : i32
    %0 = arith.muli %arg0, %c1_i32 : i32
    %1 = arith.addi %0, %arg1 : i32
    %c0_i32 = arith.constant 0 : i32
    %c0_i32_0 = arith.constant 0 : i32
    return %1, %c0_i32 : i32, i32
  }
  func.func @transform_1(%arg0: i32, %arg1: i32) -> (i32, i32) {
    %c0_i32 = arith.constant 0 : i32
    %c0_i32_0 = arith.constant 0 : i32
    %c0_i32_1 = arith.constant 0 : i32
    return %c0_i32, %c0_i32_0 : i32, i32
  }
  func.func @transform_2(%arg0: i32, %arg1: i32) -> (i32, i32) {
    %c0_i32 = arith.constant 0 : i32
    %c0_i32_0 = arith.constant 0 : i32
    return %arg0, %c0_i32 : i32, i32
  }
}

</mosaic_0001>

<llo_original>
// kernel: tpu_custom_call.1
$region0: #{tpu_custom_call.1}
  #allocation0 [shape = 'u32[]', space=smem, size = 0x4, offset = 0x4, fixed_abs, tag = 'smem constant byte address 0x4 - core index']
  #allocation1 [shape = 'u32[144,128]{1,0:T(1,128)}', space=vmem, size = 0x12000, scoped, tag = 'internal scratch']
  %s0 = inlined_call_operand.vmem [shape: bf16[128,147], index: 0, kind: input, shape index: {}]
  %s1 = inlined_call_operand.vmem [shape: bf16[147,128], index: 1, kind: input, shape index: {}]
  %s2 = inlined_call_operand.hbm [shape: f32[8,128], index: 2, kind: output, shape index: {}]
  %s3 = sld [smem:[#allocation0]]
  $region22: #{tpu_custom_call.1} parent=0
    _
  %s5 = ssub.s32 1, %s3
  %s6 = scalar_select 0, %s5, %s3
  $region1: #{tpu_custom_call.1} parent=0
    #allocation2 [shape = 'u8[4096]{0}', space=vmem, size = 0x1000, scoped, tag = 'output window, operand 0, single buffered']
    #allocation3 [shape = 's32[1]{0}', space=sflag, size = 0x4, scoped, tag = 'scoped memory for tpu_custom_call.1']
    %7 = vsyncpa [#allocation3], 0
    // Predicated region
    $region2: #{tpu_custom_call.1} parent=1 // pred_check
      _
    $region3: #{tpu_custom_call.1} parent=1 // pred_check_branch
      %9 = sbr.rel (0) target = $region5
    $region4: #{tpu_custom_call.1} parent=1 // pred_region
      %s10 = sadd.s32 0, 0
      %s11 = smul.u32 16, %s10
      %p12 = scmp.lt.s32.totalorder %s11, 15
      %s13 = scalar_select %p12, %s11, 15
      %s14 = smul.addr %s13, 2
      %s15 = smul.addr %s14, 4
      %s16 = scalar_lea.vmem %s0, %s15
      %s17 = sadd.s32 0, 0
      %s18 = smul.u32 16, %s17
    $region5: #{tpu_custom_call.1} parent=1 // pred_fallthru
      _
    // Predicated region
    $region6: #{tpu_custom_call.1} parent=1 // pred_check
      _
    $region7: #{tpu_custom_call.1} parent=1 // pred_check_branch
      %20 = sbr.rel (0) target = $region9
    $region8: #{tpu_custom_call.1} parent=1 // pred_region
      _
    $region9: #{tpu_custom_call.1} parent=1 // pred_fallthru
      _
    %s21 = sadd.s32 0, 0
    %s22 = smul.u32 16, %s21
    %p23 = scmp.lt.s32.totalorder %s22, 15
    %s24 = scalar_select %p23, %s22, 15
    %s25 = smul.addr %s24, 2
    %s26 = smul.addr %s25, 4
    %s27 = scalar_lea.vmem %s0, %s26
    %s28 = sadd.s32 0, 0
    %s29 = smul.u32 16, %s28
    %p30 = scmp.lt.s32.totalorder %s29, 15
    %s31 = scalar_select %p30, %s29, 15
    %s32 = smul.addr %s31, 2
    %s33 = smul.addr %s32, 4
    %s34 = scalar_lea.vmem %s0, %s33
    %s35 = sadd.s32 0, 0
    %s36 = smul.u32 16, %s35
    %p38 = scmp.eq.s32.totalorder 0, 0
    // Predicated region
    $region10: #{tpu_custom_call.1} parent=1 // pred_check
      %p39 = pneg %p38
    $region11: #{tpu_custom_call.1} parent=1 // pred_check_branch
      %41 = sbr.rel (%p39) target = $region13
    $region12: #{tpu_custom_call.1} parent=1 // pred_region
      %42 = vst [vmem:[#allocation2] sm:$0xff] 0.0
    $region13: #{tpu_custom_call.1} parent=1 // pred_fallthru
      _
    %s43 = sadd.s32 0, 0
    %s44 = smul.u32 %s43, 128
    %s45 = smul.u32 0, 2
    %s46 = smul.addr %s45, 4
    %s47 = scalar_lea.vmem %s34, %s46
    %v48 = vld [vmem:[%s47] sm:$0xff]
    %v49 = vld [vmem:[%s47 + $0x8] sm:$0xff]
    %v50 = vld [vmem:[%s47 + $0x10] sm:$0xff]
    %v51 = vld [vmem:[%s47 + $0x18] sm:$0xff]
    %v52 = vld [vmem:[%s47 + $0x20] sm:$0xff]
    %v53 = vld [vmem:[%s47 + $0x28] sm:$0xff]
    %v54 = vld [vmem:[%s47 + $0x30] sm:$0xff]
    %v55 = vld [vmem:[%s47 + $0x38] sm:$0xff]
    %v56 = vld [vmem:[%s47 + $0x40] sm:$0xff]
    %v57 = vld [vmem:[%s47 + $0x48] sm:$0xff]
    %v58 = vld [vmem:[%s47 + $0x50] sm:$0xff]
    %v59 = vld [vmem:[%s47 + $0x58] sm:$0xff]
    %v60 = vld [vmem:[%s47 + $0x60] sm:$0xff]
    %v61 = vld [vmem:[%s47 + $0x68] sm:$0xff]
    %v62 = vld [vmem:[%s47 + $0x70] sm:$0xff]
    %v63 = vld [vmem:[%s47 + $0x78] sm:$0xff]
    %v64 = vld [vmem:[%s1] sm:$0xf]
    %v65 = vld [vmem:[%s1 + $0x4] sm:$0xf]
    %v66 = vld [vmem:[%s1 + $0x8] sm:$0xf]
    %v67 = vld [vmem:[%s1 + $0xc] sm:$0xf]
    %v68 = vld [vmem:[%s1 + $0x10] sm:$0xf]
    %v69 = vld [vmem:[%s1 + $0x14] sm:$0xf]
    %v70 = vld [vmem:[%s1 + $0x18] sm:$0xf]
    %v71 = vld [vmem:[%s1 + $0x1c] sm:$0xf]
    %v72 = vld [vmem:[%s1 + $0x20] sm:$0xf]
    %v73 = vld [vmem:[%s1 + $0x24] sm:$0xf]
    %v74 = vld [vmem:[%s1 + $0x28] sm:$0xf]
    %v75 = vld [vmem:[%s1 + $0x2c] sm:$0xf]
    %v76 = vld [vmem:[%s1 + $0x30] sm:$0xf]
    %v77 = vld [vmem:[%s1 + $0x34] sm:$0xf]
    %v78 = vld [vmem:[%s1 + $0x38] sm:$0xf]
    %v79 = vld [vmem:[%s1 + $0x3c] sm:$0xf]
    %v80 = vld [vmem:[%s1 + $0x40] sm:$0xf]
    %v81 = vld [vmem:[%s1 + $0x44] sm:$0xf]
    %v82 = vld [vmem:[%s1 + $0x48] sm:$0x3]
    %v99 = vunpack.c.l.b16 %v48
    %v100 = vunpack.c.h.b16 %v48
    %v101 = vunpack.c.l.b16 %v49
    %v102 = vunpack.c.h.b16 %v49
    %v103 = vunpack.c.l.b16 %v50
    %v104 = vunpack.c.h.b16 %v50
    %v105 = vunpack.c.l.b16 %v51
    %v106 = vunpack.c.h.b16 %v51
    %v107 = vunpack.c.l.b16 %v52
    %v108 = vunpack.c.h.b16 %v52
    %v109 = vunpack.c.l.b16 %v53
    %v110 = vunpack.c.h.b16 %v53
    %v111 = vunpack.c.l.b16 %v54
    %v112 = vunpack.c.h.b16 %v54
    %v113 = vunpack.c.l.b16 %v55
    %v114 = vunpack.c.h.b16 %v55
    %v115 = vunpack.c.l.b16 %v56
    %v116 = vunpack.c.h.b16 %v56
    %v117 = vunpack.c.l.b16 %v57
    %v118 = vunpack.c.h.b16 %v57
    %v119 = vunpack.c.l.b16 %v58
    %v120 = vunpack.c.h.b16 %v58
    %v121 = vunpack.c.l.b16 %v59
    %v122 = vunpack.c.h.b16 %v59
    %v123 = vunpack.c.l.b16 %v60
    %v124 = vunpack.c.h.b16 %v60
    %v125 = vunpack.c.l.b16 %v61
    %v126 = vunpack.c.h.b16 %v61
    %v127 = vunpack.c.l.b16 %v62
    %v128 = vunpack.c.h.b16 %v62
    %v129 = vunpack.c.l.b16 %v63
    %v130 = vunpack.c.h.b16 %v63
    %v131 = vpack.c.b16 %v101, %v99
    %v132 = vpack.c.b16 %v102, %v100
    %v133 = vpack.c.b16 %v105, %v103
    %v134 = vpack.c.b16 %v106, %v104
    %v135 = vpack.c.b16 %v109, %v107
    %v136 = vpack.c.b16 %v110, %v108
    %v137 = vpack.c.b16 %v113, %v111
    %v138 = vpack.c.b16 %v114, %v112
    %v139 = vpack.c.b16 %v117, %v115
    %v140 = vpack.c.b16 %v118, %v116
    %v141 = vpack.c.b16 %v121, %v119
    %v142 = vpack.c.b16 %v122, %v120
    %v143 = vpack.c.b16 %v125, %v123
    %v144 = vpack.c.b16 %v126, %v124
    %v145 = vpack.c.b16 %v129, %v127
    %v146 = vpack.c.b16 %v130, %v128
    %v174 = vunpack.c.l.b16 %v64
    %v175 = vunpack.c.l.b16 %v65
    %v176 = vunpack.c.l.b16 %v66
    %v177 = vunpack.c.l.b16 %v67
    %v178 = vunpack.c.l.b16 %v68
    %v179 = vunpack.c.l.b16 %v69
    %v180 = vunpack.c.l.b16 %v70
    %v181 = vunpack.c.l.b16 %v71
    %v182 = vunpack.c.l.b16 %v72
    %v183 = vunpack.c.l.b16 %v73
    %v184 = vunpack.c.l.b16 %v74
    %v185 = vunpack.c.l.b16 %v75
    %v186 = vunpack.c.l.b16 %v76
    %v187 = vunpack.c.l.b16 %v77
    %v188 = vunpack.c.l.b16 %v78
    %v189 = vunpack.c.l.b16 %v79
    %v190 = vunpack.c.l.b16 %v80
    %v191 = vunpack.c.l.b16 %v81
    %v192 = vunpack.c.l.b16 %v82
    %v193 = vpack.c.b16 %v175, %v174
    %v194 = vpack.c.b16 %v177, %v176
    %v195 = vpack.c.b16 %v179, %v178
    %v196 = vpack.c.b16 %v181, %v180
    %v197 = vpack.c.b16 %v183, %v182
    %v198 = vpack.c.b16 %v185, %v184
    %v199 = vpack.c.b16 %v187, %v186
    %v200 = vpack.c.b16 %v189, %v188
    %v201 = vpack.c.b16 %v191, %v190
    %v202 = vpack.c.b16 %v192, %v192
    %vm212 = vcmask 154624
    %v214 = vsel %vm212, %v132, 0
    %v217 = vsel %vm212, %v134, 0
    %v220 = vsel %vm212, %v136, 0
    %v223 = vsel %vm212, %v138, 0
    %v226 = vsel %vm212, %v140, 0
    %v229 = vsel %vm212, %v142, 0
    %v232 = vsel %vm212, %v144, 0
    %v235 = vsel %vm212, %v146, 0
    %vm237 = vcmask 1040384
    %vm238 = vcmask 1041408
    %v239 = vsel %vm237, 4294967295, 65535
    %v240 = vsel %vm238, %v239, 0
    %v242 = vand.u32 %v202, %v240
    %244 = vmatprep.subr.bf16.mxu0 0
    %245 = vmatpush1.bf16.msra.mxu0 %v200
    %246 = vmatprep.subr.bf16.mxu0 0
    %247 = vmatpush1.bf16.msra.mxu0 %v199
    %248 = vmatprep.subr.bf16.mxu0 0
    %249 = vmatpush1.bf16.msra.mxu0 %v198
    %250 = vmatprep.subr.bf16.mxu0 0
    %251 = vmatpush1.bf16.msra.mxu0 %v197
    %252 = vmatprep.subr.bf16.mxu0 0
    %253 = vmatpush1.bf16.msra.mxu0 %v196
    %254 = vmatprep.subr.bf16.mxu0 0
    %255 = vmatpush1.bf16.msra.mxu0 %v195
    %256 = vmatprep.subr.bf16.mxu0 0
    %257 = vmatpush1.bf16.msra.mxu0 %v194
    %258 = vmatprep.subr.bf16.mxu0 0
    %259 = vmatpush1.bf16.msra.mxu0 %v193
    %260 = vmatprep.subr.bf16.mxu0 0
    %261 = vmatpush2.bf16.msra.mxu0 0
    %262 = vmatprep.subr.bf16.mxu0 0
    %263 = vmatpush2.bf16.msra.mxu0 0
    %264 = vmatprep.subr.bf16.mxu0 0
    %265 = vmatpush2.bf16.msra.mxu0 0
    %266 = vmatprep.subr.bf16.mxu0 0
    %267 = vmatpush2.bf16.msra.mxu0 0
    %268 = vmatprep.subr.bf16.mxu0 0
    %269 = vmatpush2.bf16.msra.mxu0 0
    %270 = vmatprep.subr.bf16.mxu0 0
    %271 = vmatpush2.bf16.msra.mxu0 0
    %272 = vmatprep.subr.bf16.mxu0 0
    %273 = vmatpush2.bf16.msra.mxu0 %v242
    %274 = vmatprep.subr.bf16.mxu0 0
    %275 = vmatpush2.bf16.msra.mxu0 %v201
    %276 = vmatprep.mubr.bf16.mxu0 %v214
    %277 = vmatmul.mubr.bf16.gmra.mxu0 %v131
    %v278 = vpop.f32.mrf.mxu0
    %v279 = vadd.f32 0.0, %v278
    %v280 = vpop.f32.mrf.mxu0
    %v281 = vpop.f32.mrf.mxu0
    %v282 = vadd.f32 0.0, %v281
    %v283 = vpop.f32.mrf.mxu0
    %284 = vmatprep.mubr.bf16.mxu0 %v217
    %285 = vmatmul.mubr.bf16.gmra.mxu0 %v133
    %v286 = vpop.f32.mrf.mxu0
    %v287 = vadd.f32 0.0, %v286
    %v288 = vpop.f32.mrf.mxu0
    %v289 = vpop.f32.mrf.mxu0
    %v290 = vadd.f32 0.0, %v289
    %v291 = vpop.f32.mrf.mxu0
    %292 = vmatprep.mubr.bf16.mxu0 %v220
    %293 = vmatmul.mubr.bf16.gmra.mxu0 %v135
    %v294 = vpop.f32.mrf.mxu0
    %v295 = vadd.f32 0.0, %v294
    %v296 = vpop.f32.mrf.mxu0
    %v297 = vpop.f32.mrf.mxu0
    %v298 = vadd.f32 0.0, %v297
    %v299 = vpop.f32.mrf.mxu0
    %300 = vmatprep.mubr.bf16.mxu0 %v223
    %301 = vmatmul.mubr.bf16.gmra.mxu0 %v137
    %v302 = vpop.f32.mrf.mxu0
    %v303 = vadd.f32 0.0, %v302
    %v304 = vpop.f32.mrf.mxu0
    %v305 = vpop.f32.mrf.mxu0
    %v306 = vadd.f32 0.0, %v305
    %v307 = vpop.f32.mrf.mxu0
    %308 = vmatprep.mubr.bf16.mxu0 %v226
    %309 = vmatmul.mubr.bf16.gmra.mxu0 %v139
    %v310 = vpop.f32.mrf.mxu0
    %v311 = vadd.f32 0.0, %v310
    %v312 = vpop.f32.mrf.mxu0
    %v313 = vpop.f32.mrf.mxu0
    %v314 = vadd.f32 0.0, %v313
    %v315 = vpop.f32.mrf.mxu0
    %316 = vmatprep.mubr.bf16.mxu0 %v229
    %317 = vmatmul.mubr.bf16.gmra.mxu0 %v141
    %v318 = vpop.f32.mrf.mxu0
    %v319 = vadd.f32 0.0, %v318
    %v320 = vpop.f32.mrf.mxu0
    %v321 = vpop.f32.mrf.mxu0
    %v322 = vadd.f32 0.0, %v321
    %v323 = vpop.f32.mrf.mxu0
    %324 = vmatprep.mubr.bf16.mxu0 %v232
    %325 = vmatmul.mubr.bf16.gmra.mxu0 %v143
    %v326 = vpop.f32.mrf.mxu0
    %v327 = vadd.f32 0.0, %v326
    %v328 = vpop.f32.mrf.mxu0
    %v329 = vpop.f32.mrf.mxu0
    %v330 = vadd.f32 0.0, %v329
    %v331 = vpop.f32.mrf.mxu0
    %332 = vmatprep.mubr.bf16.mxu0 %v235
    %333 = vmatmul.mubr.bf16.gmra.mxu0 %v145
    %v334 = vpop.f32.mrf.mxu0
    %v335 = vadd.f32 0.0, %v334
    %v336 = vpop.f32.mrf.mxu0
    %v337 = vpop.f32.mrf.mxu0
    %v338 = vadd.f32 0.0, %v337
    %v339 = vpop.f32.mrf.mxu0
    %340 = vdwg.mxu0
    %v341 = vand.u32 2147483647, %v279
    %v342 = vand.u32 2147483647, %v282
    %v343 = vand.u32 2147483647, %v287
    %v344 = vand.u32 2147483647, %v290
    %v345 = vand.u32 2147483647, %v295
    %v346 = vand.u32 2147483647, %v298
    %v347 = vand.u32 2147483647, %v303
    %v348 = vand.u32 2147483647, %v306
    %v349 = vand.u32 2147483647, %v311
    %v350 = vand.u32 2147483647, %v314
    %v351 = vand.u32 2147483647, %v319
    %v352 = vand.u32 2147483647, %v322
    %v353 = vand.u32 2147483647, %v327
    %v354 = vand.u32 2147483647, %v330
    %v355 = vand.u32 2147483647, %v335
    %v356 = vand.u32 2147483647, %v338
    %s357 = sadd.s32 %s44, 0
    %v358 = vlaneseq
    %v359 = vshrl.u32 %v358, 7
    %v360 = vadd.s32 %v359, 8
    %v361 = vadd.s32 %v359, 16
    %v362 = vadd.s32 %v359, 24
    %v363 = vadd.s32 %v359, 32
    %v364 = vadd.s32 %v359, 40
    %v365 = vadd.s32 %v359, 48
    %v366 = vadd.s32 %v359, 56
    %v367 = vadd.s32 %v359, 64
    %v368 = vadd.s32 %v359, 72
    %v369 = vadd.s32 %v359, 80
    %v370 = vadd.s32 %v359, 88
    %v371 = vadd.s32 %v359, 96
    %v372 = vadd.s32 %v359, 104
    %v373 = vadd.s32 %v359, 112
    %v374 = vadd.s32 %v359, 120
    %v375 = vstv %s357
    %v376 = vadd.s32 %v375, %v359
    %v377 = vadd.s32 %v375, %v360
    %v378 = vadd.s32 %v375, %v361
    %v379 = vadd.s32 %v375, %v362
    %v380 = vadd.s32 %v375, %v363
    %v381 = vadd.s32 %v375, %v364
    %v382 = vadd.s32 %v375, %v365
    %v383 = vadd.s32 %v375, %v366
    %v384 = vadd.s32 %v375, %v367
    %v385 = vadd.s32 %v375, %v368
    %v386 = vadd.s32 %v375, %v369
    %v387 = vadd.s32 %v375, %v370
    %v388 = vadd.s32 %v375, %v371
    %v389 = vadd.s32 %v375, %v372
    %v390 = vadd.s32 %v375, %v373
    %v391 = vadd.s32 %v375, %v374
    %vm392 = vcmp.lt.s32.totalorder %v376, 128
    %vm393 = vcmp.lt.s32.totalorder %v377, 128
    %vm394 = vcmp.lt.s32.totalorder %v378, 128
    %vm395 = vcmp.lt.s32.totalorder %v379, 128
    %vm396 = vcmp.lt.s32.totalorder %v380, 128
    %vm397 = vcmp.lt.s32.totalorder %v381, 128
    %vm398 = vcmp.lt.s32.totalorder %v382, 128
    %vm399 = vcmp.lt.s32.totalorder %v383, 128
    %vm400 = vcmp.lt.s32.totalorder %v384, 128
    %vm401 = vcmp.lt.s32.totalorder %v385, 128
    %vm402 = vcmp.lt.s32.totalorder %v386, 128
    %vm403 = vcmp.lt.s32.totalorder %v387, 128
    %vm404 = vcmp.lt.s32.totalorder %v388, 128
    %vm405 = vcmp.lt.s32.totalorder %v389, 128
    %vm406 = vcmp.lt.s32.totalorder %v390, 128
    %vm407 = vcmp.lt.s32.totalorder %v391, 128
    %v408 = vsel %vm392, %v341, 0.0
    %v409 = vsel %vm393, %v342, 0.0
    %v410 = vsel %vm394, %v343, 0.0
    %v411 = vsel %vm395, %v344, 0.0
    %v412 = vsel %vm396, %v345, 0.0
    %v413 = vsel %vm397, %v346, 0.0
    %v414 = vsel %vm398, %v347, 0.0
    %v415 = vsel %vm399, %v348, 0.0
    %v416 = vsel %vm400, %v349, 0.0
    %v417 = vsel %vm401, %v350, 0.0
    %v418 = vsel %vm402, %v351, 0.0
    %v419 = vsel %vm403, %v352, 0.0
    %v420 = vsel %vm404, %v353, 0.0
    %v421 = vsel %vm405, %v354, 0.0
    %v422 = vsel %vm406, %v355, 0.0
    %v423 = vsel %vm407, %v356, 0.0
    %v424 = vadd.f32 %v408, %v409
    %v425 = vadd.f32 %v424, %v410
    %v426 = vadd.f32 %v425, %v411
    %v427 = vadd.f32 %v426, %v412
    %v428 = vadd.f32 %v427, %v413
    %v429 = vadd.f32 %v428, %v414
    %v430 = vadd.f32 %v429, %v415
    %v431 = vadd.f32 %v430, %v416
    %v432 = vadd.f32 %v431, %v417
    %v433 = vadd.f32 %v432, %v418
    %v434 = vadd.f32 %v433, %v419
    %v435 = vadd.f32 %v434, %v420
    %v436 = vadd.f32 %v435, %v421
    %v437 = vadd.f32 %v436, %v422
    %v438 = vadd.f32 %v437, %v423
    %v439 = vadd.f32 %v438, 0.0
    %v440 = vld [vmem:[#allocation2] sm:$0xff]
    %v441 = vadd.f32 %v440, %v439
    %442 = vst [vmem:[#allocation2] sm:$0xff] %v441
    // Predicated region
    $region14: #{tpu_custom_call.1} parent=1 // pred_check
      _
    $region15: #{tpu_custom_call.1} parent=1 // pred_check_branch
      %444 = sbr.rel (0) target = $region17
    $region16: #{tpu_custom_call.1} parent=1 // pred_region
      %s446 = ssub.s32 128, 128
      %447 = vsyncadd [#allocation3], %s446
      %s449 = sshll.u32 [#allocation2], 4
      %s450 = int_to_ptr.vmem [resolvable:$true] %s449
      %452 = dma.vmem_to_hbm [thread:$0]  %s450, 128, %s2, [#allocation3]
    $region17: #{tpu_custom_call.1} parent=1 // pred_fallthru
      _
    // Predicated region
    $region18: #{tpu_custom_call.1} parent=1 // pred_check
      _
    $region19: #{tpu_custom_call.1} parent=1 // pred_check_branch
      %454 = sbr.rel (0) target = $region21
    $region20: #{tpu_custom_call.1} parent=1 // pred_region
      %455 = dma.done [#allocation3], 128
    $region21: #{tpu_custom_call.1} parent=1 // pred_fallthru
      _
    %456 = vsyncpa [#allocation3], 1

</llo_original>
